<compile_context>
chip_gen: v5e
topology: v5e:2x2
jax: 0.10.0
libtpu: 0.0.40
codegen_flags: <defaults>
</compile_context>

<pallas_src>
import types

import numpy as np
import jax
import jax.numpy as jnp
from jax.experimental import pallas as pl
from jax.experimental.pallas import tpu as pltpu


def _round_up(x, m):
    return (x + m - 1) // m * m


# ----------------------------------------------------------------------------
# Pallas kernel: one (row-tile x col-tile) output block per grid step.
# K (the contraction dim) lives fully inside the block -> single MXU dot,
# no accumulator scratch, result written straight to the output block.
# ----------------------------------------------------------------------------
def _rowblock_matmul_kernel(x_ref, m_ref, o_ref):
    o_ref[...] = jnp.dot(x_ref[...], m_ref[...],
                         preferred_element_type=jnp.float32)


def apply_matrix_last_dim(x2d, mT):
    """y = x2d @ mT.   x2d: (M, K),  mT: (K, Nout)  ->  (M, Nout) f32.

    The weight's column dim is zero-padded to a multiple of 128 (lane-dense
    stores) and tiled so the grid has several "parallel" steps; K is never
    tiled (it is the full last dim of x2d / first dim of mT).
    """
    M, K = x2d.shape
    K2, Nout = mT.shape
    assert K == K2

    # Lane-dense output: pad weight columns to a multiple of 128, slice after.
    Npad = _round_up(Nout, 128)
    mT_f32 = jnp.asarray(mT, dtype=jnp.float32)
    if Npad != Nout:
        mT_f32 = jnp.pad(mT_f32, ((0, 0), (0, Npad - Nout)))

    # Generation-aware VMEM budget (v7x: 64 MiB physical, v5e/v6e: 128 MiB).
    try:
        vmem_cap = int(pltpu.get_tpu_info().vmem_capacity_bytes)
    except Exception:  # pragma: no cover - conservative fallback
        vmem_cap = 64 * 1024 * 1024
    vmem_budget = min(vmem_cap // 2, 48 * 1024 * 1024)

    def footprint(tm, tn):  # double-buffered in/weight/out blocks, f32
        return 2 * 4 * (tm * K + K * tn + tm * tn)

    # Row tile: full M when it fits (no pad copy, full-dim block is always legal),
    # otherwise a large multiple-of-8 tile bounded by the VMEM budget.
    x_in = x2d.astype(jnp.float32)
    tm_cap = 2048
    while tm_cap > 8 and footprint(tm_cap, 128) > (vmem_budget * 3) // 4:
        tm_cap //= 2
    if M <= tm_cap:
        tm, Mp = M, M
    else:
        tm = tm_cap
        Mp = _round_up(M, tm)
        if Mp != M:
            # TODO(synk): a ragged tail block would avoid this HBM pad copy.
            x_in = jnp.pad(x_in, ((0, Mp - M), (0, 0)))
    grid_m = Mp // tm

    # Column tile: multiples of 128, <= 512 wide, chosen so total grid steps >= 4
    # when possible (so v7x's two TensorCores + the pipeline get real work).
    n_units = Npad // 128
    want_n_blocks = max(1, -(-4 // grid_m))
    units = min(n_units, 4)
    while units > 1 and (n_units % units != 0 or n_units // units < want_n_blocks):
        units -= 1
    tn = units * 128
    grid_n = Npad // tn

    cost = pl.CostEstimate(
        flops=int(2 * Mp * K * Npad),
        transcendentals=0,
        bytes_accessed=int(4 * (Mp * K + K * Npad + Mp * Npad)),
    )

    out = pl.pallas_call(
        _rowblock_matmul_kernel,
        out_shape=jax.ShapeDtypeStruct((Mp, Npad), jnp.float32),
        grid=(grid_m, grid_n),
        in_specs=[
            pl.BlockSpec((tm, K), lambda i, j: (i, 0)),   # activation row tile
            pl.BlockSpec((K, tn), lambda i, j: (0, j)),   # weight column tile
        ],
        out_specs=pl.BlockSpec((tm, tn), lambda i, j: (i, j)),
        compiler_params=pltpu.CompilerParams(
            dimension_semantics=("parallel", "parallel"),
            vmem_limit_bytes=vmem_budget,
        ),
        cost_estimate=cost,
    )(x_in, mT_f32)

    if Mp != M:
        out = out[:M]
    if Npad != Nout:
        out = out[:, :Nout]
    return out


# ----------------------------------------------------------------------------
# Exact per-axis operators (match DCT.dct / DCT.idct with norm=None)
# ----------------------------------------------------------------------------
def dct_matrix(N):
    """V[k] = 2 * sum_n x[n] * cos(pi*k*(2n+1)/(2N))  (torch-style DCT-II x2)."""
    n = np.arange(N)
    k = np.arange(N)
    return 2.0 * np.cos(np.pi * np.outer(k, 2 * n + 1) / (2.0 * N))


def idct_matrix(N):
    """Exact inverse of dct_matrix (the scaled DCT-III computed by DCT.idct)."""
    n = np.arange(N)
    k = np.arange(N)
    W = np.cos(np.pi * np.outer(2 * n + 1, k) / (2.0 * N)) / N
    W[:, 0] = 1.0 / (2.0 * N)
    return W


def folded_axis_matrix_np(L, Lout):
    """idct_{Lout}  o  zero-pad  o  dct_L   as a single (Lout, L) float64 matrix."""
    return idct_matrix(Lout)[:, :L] @ dct_matrix(L)


def dct_forward(x, int_scale, float_scale):
    """DCT.forward:  dct_2d -> ZeroPad2d(right/bottom) -> idct_2d  (fully folded)."""
    # Same float arithmetic as the torch module (int(H * res_scale)); see review note.
    res_scale = (int_scale + float_scale) / int_scale
    N_, C, H, W = x.shape
    outH, outW = int(H * res_scale), int(W * res_scale)

    A_H = folded_axis_matrix_np(H, outH)            # (outH, H) float64
    A_W = folded_axis_matrix_np(W, outW)            # (outW, W) float64

    kron_bytes = (outH * outW) * (H * W) * 4
    if kron_bytes <= 32 * 1024 * 1024:
        # Fold BOTH axes into one matrix and apply with a single lane-dense GEMM.
        A_full = np.kron(A_H, A_W).astype(np.float32)      # (outH*outW, H*W)
        y = apply_matrix_last_dim(x.reshape(N_ * C, H * W), jnp.asarray(A_full.T))
        return y.reshape(N_, C, outH, outW)

    # Fallback for very large planes (kron matrix would not be VMEM/HBM friendly):
    # two per-axis passes with the same GEMM helper.
    # TODO(synk): fallback still materializes an HBM transpose between passes;
    # could be made transpose-free with a dot_general contracting axis -2.
    AW_T = jnp.asarray(A_W.T.astype(np.float32))
    AH_T = jnp.asarray(A_H.T.astype(np.float32))
    y = apply_matrix_last_dim(x.reshape(N_ * C * H, W), AW_T)
    y = y.reshape(N_, C, H, outW).swapaxes(-1, -2)          # (N, C, outW, H)
    y = apply_matrix_last_dim(y.reshape(N_ * C * outW, H), AH_T)
    return y.reshape(N_, C, outW, outH).swapaxes(-1, -2)    # (N, C, outH, outW)


# ----------------------------------------------------------------------------
# Pure-jnp reference mirroring the torch FFT-based dct/idct path (for checking)
# ----------------------------------------------------------------------------
def _ref_dct_1d(x):
    N = x.shape[-1]
    v = jnp.concatenate([x[..., ::2], x[..., 1::2][..., ::-1]], axis=-1)
    Vc = jnp.fft.fft(v, axis=-1)                       # == torch _rfft(onesided=False)
    k = -jnp.arange(N, dtype=jnp.float32) * np.pi / (2.0 * N)
    V = jnp.real(Vc) * jnp.cos(k) - jnp.imag(Vc) * jnp.sin(k)
    return 2.0 * V


def _ref_idct_1d(X):
    N = X.shape[-1]
    X_v = X / 2.0
    k = jnp.arange(N, dtype=jnp.float32) * np.pi / (2.0 * N)
    W_r, W_i = jnp.cos(k), jnp.sin(k)
    V_t_r = X_v
    V_t_i = jnp.concatenate([X_v[..., :1] * 0.0, -X_v[..., ::-1][..., :-1]], axis=-1)
    V_r = V_t_r * W_r - V_t_i * W_i
    V_i = V_t_r * W_i + V_t_i * W_r
    V = jax.lax.complex(V_r, V_i)
    v = jnp.fft.irfft(V[..., : N // 2 + 1], n=N, axis=-1)   # torch _irfft(onesided=False)
    x = jnp.zeros_like(v)
    x = x.at[..., ::2].set(v[..., : N - N // 2])
    x = x.at[..., 1::2].set(v[..., ::-1][..., : N // 2])
    return x


def reference_forward(x, int_scale, float_scale):
    res_scale = (int_scale + float_scale) / int_scale
    _, _, H, W = x.shape
    outH, outW = int(H * res_scale), int(W * res_scale)

    y = _ref_dct_1d(x)
    y = _ref_dct_1d(y.swapaxes(-1, -2)).swapaxes(-1, -2)        # dct_2d
    y = jnp.pad(y, ((0, 0), (0, 0), (0, outH - H), (0, outW - W)))
    y = _ref_idct_1d(y)
    y = _ref_idct_1d(y.swapaxes(-1, -2)).swapaxes(-1, -2)       # idct_2d
    return y


# ----------------------------------------------------------------------------
if __name__ == "__main__":
    opt = types.SimpleNamespace(scale=[2], float_scale=0.5)     # res_scale = 2.5 / 2
    int_scale = max(opt.scale)

    key = jax.random.PRNGKey(0)
    x = jax.random.normal(key, (2, 4, 16, 16), jnp.float32)

    fwd = jax.jit(lambda t: dct_forward(t, int_scale, opt.float_scale))
    out = jax.block_until_ready(fwd(x))

    assert out.shape == (2, 4, 20, 20), out.shape
    assert bool(jnp.all(jnp.isfinite(out)))

    # Correctness vs a faithful jnp mirror of the torch FFT-based path
    # (f32 kernel path is typically ~1e-4 off; tolerance left generous).
    ref = jax.block_until_ready(reference_forward(x, int_scale, opt.float_scale))
    err = float(jnp.max(jnp.abs(out - ref)))
    assert err < 5e-2, f"max abs error vs FFT reference: {err}"

    print("KERNEL_OK")
</pallas_src>

<mosaic_0001>
module attributes {stable_mosaic.version = 11 : i64} {
  func.func @_rowblock_matmul_kernel(%arg0: i32, %arg1: i32, %arg2: memref<8x256xf32, #tpu.memory_space<vmem>>, %arg3: memref<256x128xf32, #tpu.memory_space<vmem>>, %arg4: memref<8x128xf32, #tpu.memory_space<vmem>>) attributes {dimension_semantics = [#tpu.dimension_semantics<parallel>, #tpu.dimension_semantics<parallel>], iteration_bounds = array<i64: 1, 4>, scalar_prefetch = 0 : i64, scratch_operands = 0 : i64, tpu.core_type = #tpu.core_type<tc>, window_params = [{transform_indices = @transform_0, window_bounds = array<i64: 8, 256>}, {transform_indices = @transform_1, window_bounds = array<i64: 256, 128>}, {transform_indices = @transform_2, window_bounds = array<i64: 8, 128>}]} {
    %c0 = arith.constant 0 : index
    %c0_0 = arith.constant 0 : index
    %0 = vector.load %arg2[%c0, %c0_0] : memref<8x256xf32, #tpu.memory_space<vmem>>, vector<8x256xf32>
    %c0_1 = arith.constant 0 : index
    %c0_2 = arith.constant 0 : index
    %1 = vector.load %arg3[%c0_1, %c0_2] : memref<256x128xf32, #tpu.memory_space<vmem>>, vector<256x128xf32>
    %cst = arith.constant dense<0.000000e+00> : vector<8x128xf32>
    %2 = tpu.matmul %0, %1, %cst {dimension_numbers = #tpu.dot_dimension_numbers<[1], [0], [0], [1], [0, 0, 1, 1], [], []>} : vector<8x256xf32>, vector<256x128xf32>, vector<8x128xf32> -> vector<8x128xf32>
    %c0_3 = arith.constant 0 : index
    %c0_4 = arith.constant 0 : index
    %3 = vector.load %arg4[%c0_3, %c0_4] : memref<8x128xf32, #tpu.memory_space<vmem>>, vector<8x128xf32>
    tpu.vector_store %arg4[%c0_3, %c0_4], %2 {strides = array<i32>} : memref<8x128xf32, #tpu.memory_space<vmem>>, vector<8x128xf32>,
    return
  }
  func.func @transform_0(%arg0: i32, %arg1: i32) -> (i32, i32) {
    %c0_i32 = arith.constant 0 : i32
    %c0_i32_0 = arith.constant 0 : i32
    return %arg0, %c0_i32 : i32, i32
  }
  func.func @transform_1(%arg0: i32, %arg1: i32) -> (i32, i32) {
    %c0_i32 = arith.constant 0 : i32
    %c0_i32_0 = arith.constant 0 : i32
    return %c0_i32, %arg1 : i32, i32
  }
  func.func @transform_2(%arg0: i32, %arg1: i32) -> (i32, i32) {
    %c0_i32 = arith.constant 0 : i32
    return %arg0, %arg1 : i32, i32
  }
}

</mosaic_0001>

<llo_original>
// kernel: _lambda_.1
$region0: #{_lambda_.1}
  #allocation0 [shape = 'u32[]', space=smem, size = 0x4, offset = 0x4, fixed_abs, tag = 'smem constant byte address 0x4 - core index']
  #allocation1 [shape = 'u32[72,128]{1,0:T(1,128)}', space=vmem, size = 0x9000, scoped, tag = 'internal scratch']
  %s0 = inlined_call_operand.vmem [shape: f32[8,256], index: 0, kind: input, shape index: {}]
  %s1 = inlined_call_operand.hbm [shape: f32[256,512], index: 1, kind: input, shape index: {}]
  %s2 = inlined_call_operand.vmem [shape: f32[8,512], index: 2, kind: output, shape index: {}]
  %s3 = sld [smem:[#allocation0]]
  $region45: #{_lambda_.1} parent=0
    _
  %s5 = ssub.s32 1, %s3
  %s6 = scalar_select 0, %s5, %s3
  $region1: #{_lambda_.1} parent=0
    #allocation2 [shape = 'u8[262144]{0}', space=vmem, size = 0x40000, scoped, tag = 'input window, operand 1']
    #allocation3 [shape = 's32[2]{0}', space=sflag, size = 0x8, scoped, tag = 'scoped memory for _lambda_.1']
    %7 = vsyncpa [#allocation3], 0
    %s8 = scalar_lea.sflag [#allocation3], 1
    %9 = vsyncpa %s8, 0
    loop: start=0, step=1, limit=6
    $region2: #{_lambda_.1} parent=1 // loop_pre_header
      _
    $region3: #{_lambda_.1} parent=1 // loop_header
      %s11 = sphi 0, %s15
      %p12 = scmp.ge.s32.totalorder %s11, 6
      %s18 = sphi 0, %s30
      %s19 = sphi 0, %s26
      %s20 = sphi 0, %s18
      %s21 = sphi 0, %s19
      %s22 = sphi 0, %s20
      %s23 = sphi 0, %s21
      %s33 = sphi 0, %s35
      %s36 = sphi 0, %s33
      %s37 = sphi 0, %s36
      %s53 = sphi 0, %s37
      %s59 = sphi 0, %s61
      %s62 = sphi 0, %s59
      %s63 = sphi 0, %s62
      %s79 = sphi 0, %s63
      %s87 = sphi 0, %s89
      %s90 = sphi 0, %s87
      %s91 = sphi 0, %s90
      %s107 = sphi 0, %s91
    $region4: #{_lambda_.1} parent=1 // loop_header_branch
      %14 = sbr.rel (%p12) target = $region8
    $region5: #{_lambda_.1} parent=1 // loop_body
      %s16 = ssub.s32 %s11, 1
      %s17 = ssub.s32 %s11, 2
      %s24 = sadd.s32 1, %s19
      %p25 = scmp.ge.s32.totalorder %s24, 4
      %s26 = scalar_select %p25, 0, %s24
      %s27 = sadd.s32 1, %s18
      %s28 = scalar_select %p25, %s27, %s18
      %p29 = scmp.ge.s32.totalorder %s28, 1
      %s30 = scalar_select %p29, 0, %s28
      %s31 = ssub.s32 %s18, %s30
      %p32 = scmp.eq.s32.totalorder %s31, 0
      %s34 = sadd.s32 %s33, 1
      %s35 = scalar_select %p32, %s33, %s34
      %p38 = pneg %p32
      %p39 = scmp.eq.s32.totalorder %s11, 3
      %p40 = por %p38, %p39
      %p41 = scmp.ne.s32.totalorder %s33, %s36
      %p42 = scmp.eq.s32.totalorder %s11, 0
      %p43 = por %p41, %p42
      %p44 = scmp.ne.s32.totalorder %s33, %s36
      %p45 = scmp.eq.s32.totalorder %s16, 3
      %p46 = por %p44, %p45
      %p47 = scmp.ne.s32.totalorder %s36, %s37
      %p48 = scmp.eq.s32.totalorder %s16, 0
      %p49 = por %p47, %p48
      %p50 = scmp.ne.s32.totalorder %s36, %s37
      %p51 = scmp.eq.s32.totalorder %s17, 3
      %p52 = por %p50, %p51
      %p54 = scmp.ne.s32.totalorder %s37, %s53
      %p55 = scmp.eq.s32.totalorder %s17, 0
      %p56 = por %p54, %p55
      %s57 = ssub.s32 %s19, %s26
      %p58 = scmp.eq.s32.totalorder %s57, 0
      %s60 = sadd.s32 %s59, 1
      %s61 = scalar_select %p58, %s59, %s60
      %p64 = pneg %p58
      %p65 = scmp.eq.s32.totalorder %s11, 3
      %p66 = por %p64, %p65
      %p67 = scmp.ne.s32.totalorder %s59, %s62
      %p68 = scmp.eq.s32.totalorder %s11, 0
      %p69 = por %p67, %p68
      %p70 = scmp.ne.s32.totalorder %s59, %s62
      %p71 = scmp.eq.s32.totalorder %s16, 3
      %p72 = por %p70, %p71
      %p73 = scmp.ne.s32.totalorder %s62, %s63
      %p74 = scmp.eq.s32.totalorder %s16, 0
      %p75 = por %p73, %p74
      %p76 = scmp.ne.s32.totalorder %s62, %s63
      %p77 = scmp.eq.s32.totalorder %s17, 3
      %p78 = por %p76, %p77
      %p80 = scmp.ne.s32.totalorder %s63, %s79
      %p81 = scmp.eq.s32.totalorder %s17, 0
      %p82 = por %p80, %p81
      %s83 = ssub.s32 %s18, %s30
      %s84 = ssub.s32 %s19, %s26
      %s85 = sor.u32 %s83, %s84
      %p86 = scmp.eq.s32.totalorder %s85, 0
      %s88 = sadd.s32 %s87, 1
      %s89 = scalar_select %p86, %s87, %s88
      %p92 = pneg %p86
      %p93 = scmp.eq.s32.totalorder %s11, 3
      %p94 = por %p92, %p93
      %p95 = scmp.ne.s32.totalorder %s87, %s90
      %p96 = scmp.eq.s32.totalorder %s11, 0
      %p97 = por %p95, %p96
      %p98 = scmp.ne.s32.totalorder %s87, %s90
      %p99 = scmp.eq.s32.totalorder %s16, 3
      %p100 = por %p98, %p99
      %p101 = scmp.ne.s32.totalorder %s90, %s91
      %p102 = scmp.eq.s32.totalorder %s16, 0
      %p103 = por %p101, %p102
      %p104 = scmp.ne.s32.totalorder %s90, %s91
      %p105 = scmp.eq.s32.totalorder %s17, 3
      %p106 = por %p104, %p105
      %p108 = scmp.ne.s32.totalorder %s91, %s107
      %p109 = scmp.eq.s32.totalorder %s17, 0
      %p110 = por %p108, %p109
      %p111 = scmp.le.s32.totalorder 1, %s11
      %p112 = scmp.lt.s32.totalorder %s11, 5
      %p113 = pnand %p111, %p112
      %p114 = pneg %p113
      // Predicated region
      $region9: #{_lambda_.1} parent=5 // pred_check
        _
      $region10: #{_lambda_.1} parent=5 // pred_check_branch
        %116 = sbr.rel (%p113) target = $region12
      $region11: #{_lambda_.1} parent=5 // pred_region
        %s117 = ssub.s32 %s11, 1
        // Predicated region
        $region13: #{_lambda_.1} parent=11 // pred_check
          %p118 = pneg %p49
        $region14: #{_lambda_.1} parent=11 // pred_check_branch
          %120 = sbr.rel (%p118) target = $region16
        $region15: #{_lambda_.1} parent=11 // pred_region
          %p121 = scmp.lt.s32.totalorder %s20, 0
          %s122 = scalar_select %p121, %s20, 0
          %s123 = smul.addr %s122, 2
          %s124 = smul.addr %s123, 8
          %s125 = scalar_lea.vmem %s0, %s124
        $region16: #{_lambda_.1} parent=11 // pred_fallthru
          _
      $region12: #{_lambda_.1} parent=5 // pred_fallthru
        _
      %p126 = scmp.lt.s32.totalorder %s11, 4
      // Predicated region
      $region17: #{_lambda_.1} parent=5 // pred_check
        %p127 = pneg %p126
      $region18: #{_lambda_.1} parent=5 // pred_check_branch
        %129 = sbr.rel (%p127) target = $region20
      $region19: #{_lambda_.1} parent=5 // pred_region
        // Predicated region
        $region21: #{_lambda_.1} parent=19 // pred_check
          %p130 = pneg %p69
        $region22: #{_lambda_.1} parent=19 // pred_check_branch
          %132 = sbr.rel (%p130) target = $region24
        $region23: #{_lambda_.1} parent=19 // pred_region
          %s133 = sand.u32 %s59, 1
          %s134 = scalar_lea.sflag [#allocation3], %s133
          %s135 = sand.u32 %s59, 1
          %s136 = smul.addr %s135, 256
          %s137 = scalar_lea.vmem [#allocation2], %s136
          %139 = vsyncadd %s134, 0
          %s140 = smul.addr %s19, 8
          %s141 = scalar_lea.hbm %s1, %s140
          %s142 = sshll.u32 %s141, 4
          %s143 = int_to_ptr.hbm [resolvable:$true] %s142
          %s144 = sshll.u32 %s137, 4
          %s145 = int_to_ptr.vmem [resolvable:$true] %s144
          %150 = dma.hbm_to_vmem [thread:$0]  %s143, 4096, %s145, %s134, 512, 128, 8
        $region24: #{_lambda_.1} parent=19 // pred_fallthru
          _
      $region20: #{_lambda_.1} parent=5 // pred_fallthru
        _
      %p151 = scmp.le.s32.totalorder 1, %s11
      %p152 = scmp.lt.s32.totalorder %s11, 5
      %p153 = pnand %p151, %p152
      %p154 = pneg %p153
      // Predicated region
      $region25: #{_lambda_.1} parent=5 // pred_check
        _
      $region26: #{_lambda_.1} parent=5 // pred_check_branch
        %156 = sbr.rel (%p153) target = $region28
      $region27: #{_lambda_.1} parent=5 // pred_region
        %s157 = ssub.s32 %s11, 1
        %s158 = sand.u32 %s62, 1
        %s159 = scalar_lea.sflag [#allocation3], %s158
        %s160 = sand.u32 %s62, 1
        %s161 = smul.addr %s160, 256
        %s162 = scalar_lea.vmem [#allocation2], %s161
        // Predicated region
        $region29: #{_lambda_.1} parent=27 // pred_check
          %p163 = pneg %p75
        $region30: #{_lambda_.1} parent=27 // pred_check_branch
          %165 = sbr.rel (%p163) target = $region32
        $region31: #{_lambda_.1} parent=27 // pred_region
          %167 = dma.done %s159, 4096
        $region32: #{_lambda_.1} parent=27 // pred_fallthru
          _
        %p168 = scmp.lt.s32.totalorder %s20, 0
        %s169 = scalar_select %p168, %s20, 0
        %s170 = smul.addr %s169, 2
        %s171 = smul.addr %s170, 8
        %s172 = scalar_lea.vmem %s0, %s171
        %p173 = pneg %p49
        %p174 = pneg %p46
        %s175 = sand.u32 %s62, 1
        %s176 = scalar_lea.sflag [#allocation3], %s175
        %s177 = sand.u32 %s62, 1
        %s178 = smul.addr %s177, 256
        %s179 = scalar_lea.vmem [#allocation2], %s178
        %p180 = pneg %p75
        %p181 = pneg %p72
        %p182 = pneg %p103
        %p183 = pneg %p100
        %p184 = scmp.lt.s32.totalorder %s20, 0
        %s185 = scalar_select %p184, %s20, 0
        %p186 = scmp.lt.s32.totalorder %s21, 3
        %s187 = scalar_select %p186, %s21, 3
        %s188 = smul.addr %s185, 4
        %s189 = sadd.s32 %s187, %s188
        %s190 = smul.addr %s189, 8
        %s191 = scalar_lea.vmem %s2, %s190
        %p192 = scmp.lt.s32.totalorder %s20, 0
        %s193 = scalar_select %p192, %s20, 0
        %s194 = smul.addr %s193, 2
        %s195 = smul.addr %s194, 8
        %s196 = scalar_lea.vmem %s0, %s195
        %p197 = scmp.lt.s32.totalorder %s20, 0
        %s198 = scalar_select %p197, %s20, 0
        %p199 = scmp.lt.s32.totalorder %s21, 3
        %s200 = scalar_select %p199, %s21, 3
        %s201 = smul.addr %s198, 4
        %s202 = sadd.s32 %s200, %s201
        %s203 = smul.addr %s202, 8
        %s204 = scalar_lea.vmem %s2, %s203
        %v205 = vld [vmem:[%s196] sm:$0xff]
        %v206 = vld [vmem:[%s196 + $0x8] sm:$0xff]
        %v207 = vld [vmem:[%s162] sm:$0xff]
        %v208 = vld [vmem:[%s162 + $0x8] sm:$0xff]
        %v209 = vld [vmem:[%s162 + $0x10] sm:$0xff]
        %v210 = vld [vmem:[%s162 + $0x18] sm:$0xff]
        %v211 = vld [vmem:[%s162 + $0x20] sm:$0xff]
        %v212 = vld [vmem:[%s162 + $0x28] sm:$0xff]
        %v213 = vld [vmem:[%s162 + $0x30] sm:$0xff]
        %v214 = vld [vmem:[%s162 + $0x38] sm:$0xff]
        %v215 = vld [vmem:[%s162 + $0x40] sm:$0xff]
        %v216 = vld [vmem:[%s162 + $0x48] sm:$0xff]
        %v217 = vld [vmem:[%s162 + $0x50] sm:$0xff]
        %v218 = vld [vmem:[%s162 + $0x58] sm:$0xff]
        %v219 = vld [vmem:[%s162 + $0x60] sm:$0xff]
        %v220 = vld [vmem:[%s162 + $0x68] sm:$0xff]
        %v221 = vld [vmem:[%s162 + $0x70] sm:$0xff]
        %v222 = vld [vmem:[%s162 + $0x78] sm:$0xff]
        %v223 = vld [vmem:[%s162 + $0x80] sm:$0xff]
        %v224 = vld [vmem:[%s162 + $0x88] sm:$0xff]
        %v225 = vld [vmem:[%s162 + $0x90] sm:$0xff]
        %v226 = vld [vmem:[%s162 + $0x98] sm:$0xff]
        %v227 = vld [vmem:[%s162 + $0xa0] sm:$0xff]
        %v228 = vld [vmem:[%s162 + $0xa8] sm:$0xff]
        %v229 = vld [vmem:[%s162 + $0xb0] sm:$0xff]
        %v230 = vld [vmem:[%s162 + $0xb8] sm:$0xff]
        %v231 = vld [vmem:[%s162 + $0xc0] sm:$0xff]
        %v232 = vld [vmem:[%s162 + $0xc8] sm:$0xff]
        %v233 = vld [vmem:[%s162 + $0xd0] sm:$0xff]
        %v234 = vld [vmem:[%s162 + $0xd8] sm:$0xff]
        %v235 = vld [vmem:[%s162 + $0xe0] sm:$0xff]
        %v236 = vld [vmem:[%s162 + $0xe8] sm:$0xff]
        %v237 = vld [vmem:[%s162 + $0xf0] sm:$0xff]
        %v238 = vld [vmem:[%s162 + $0xf8] sm:$0xff]
        %239 = vmatpush.msra.mxu0 %v222
        %240 = vmatpush.msra.mxu0 %v221
        %241 = vmatpush.msra.mxu0 %v220
        %242 = vmatpush.msra.mxu0 %v219
        %243 = vmatpush.msra.mxu0 %v218
        %244 = vmatpush.msra.mxu0 %v217
        %245 = vmatpush.msra.mxu0 %v216
        %246 = vmatpush.msra.mxu0 %v215
        %247 = vmatpush.msra.mxu0 %v214
        %248 = vmatpush.msra.mxu0 %v213
        %249 = vmatpush.msra.mxu0 %v212
        %250 = vmatpush.msra.mxu0 %v211
        %251 = vmatpush.msra.mxu0 %v210
        %252 = vmatpush.msra.mxu0 %v209
        %253 = vmatpush.msra.mxu0 %v208
        %254 = vmatpush.msra.mxu0 %v207
        %255 = vmatmul.f32.gmra.mxu0 %v205
        %v256 = vpop.f32.mrf.mxu0
        %v257 = vadd.f32 0.0, %v256
        %258 = vdwg.mxu0
        %259 = vmatpush.msra.mxu0 %v238
        %260 = vmatpush.msra.mxu0 %v237
        %261 = vmatpush.msra.mxu0 %v236
        %262 = vmatpush.msra.mxu0 %v235
        %263 = vmatpush.msra.mxu0 %v234
        %264 = vmatpush.msra.mxu0 %v233
        %265 = vmatpush.msra.mxu0 %v232
        %266 = vmatpush.msra.mxu0 %v231
        %267 = vmatpush.msra.mxu0 %v230
        %268 = vmatpush.msra.mxu0 %v229
        %269 = vmatpush.msra.mxu0 %v228
        %270 = vmatpush.msra.mxu0 %v227
        %271 = vmatpush.msra.mxu0 %v226
        %272 = vmatpush.msra.mxu0 %v225
        %273 = vmatpush.msra.mxu0 %v224
        %274 = vmatpush.msra.mxu0 %v223
        %275 = vmatmul.f32.gmra.mxu0 %v206
        %v276 = vpop.f32.mrf.mxu0
        %v277 = vadd.f32 %v257, %v276
        %278 = vdwg.mxu0
        %279 = vst [vmem:[%s204] sm:$0xff] %v277
        %p280 = scmp.lt.s32.totalorder %s20, 0
        %s281 = scalar_select %p280, %s20, 0
        %p282 = scmp.lt.s32.totalorder %s21, 3
        %s283 = scalar_select %p282, %s21, 3
        %s284 = smul.addr %s281, 4
        %s285 = sadd.s32 %s283, %s284
        %s286 = smul.addr %s285, 8
        %s287 = scalar_lea.vmem %s2, %s286
        // Predicated region
        $region33: #{_lambda_.1} parent=27 // pred_check
          %p288 = pneg %p100
        $region34: #{_lambda_.1} parent=27 // pred_check_branch
          %290 = sbr.rel (%p288) target = $region36
        $region35: #{_lambda_.1} parent=27 // pred_region
          _
        $region36: #{_lambda_.1} parent=27 // pred_fallthru
          _
      $region28: #{_lambda_.1} parent=5 // pred_fallthru
        _
      %p291 = scmp.le.s32.totalorder 2, %s11
      // Predicated region
      $region37: #{_lambda_.1} parent=5 // pred_check
        %p292 = pneg %p291
      $region38: #{_lambda_.1} parent=5 // pred_check_branch
        %294 = sbr.rel (%p292) target = $region40
      $region39: #{_lambda_.1} parent=5 // pred_region
        %s295 = ssub.s32 %s11, 2
        // Predicated region
        $region41: #{_lambda_.1} parent=39 // pred_check
          %p296 = pneg %p106
        $region42: #{_lambda_.1} parent=39 // pred_check_branch
          %298 = sbr.rel (%p296) target = $region44
        $region43: #{_lambda_.1} parent=39 // pred_region
          %p299 = scmp.lt.s32.totalorder %s22, 0
          %s300 = scalar_select %p299, %s22, 0
          %p301 = scmp.lt.s32.totalorder %s23, 3
          %s302 = scalar_select %p301, %s23, 3
          %s303 = smul.addr %s300, 4
          %s304 = sadd.s32 %s302, %s303
          %s305 = smul.addr %s304, 8
          %s306 = scalar_lea.vmem %s2, %s305
        $region44: #{_lambda_.1} parent=39 // pred_fallthru
          _
      $region40: #{_lambda_.1} parent=5 // pred_fallthru
        _
    $region6: #{_lambda_.1} parent=1 // loop_footer
      %s15 = sadd.s32 1, %s11
    $region7: #{_lambda_.1} parent=1 // loop_footer_branch
      %10 = sbr.rel target = $region3
    $region8: #{_lambda_.1} parent=1 // loop_exit
      _
    %307 = vsyncpa [#allocation3], 1
    %s308 = scalar_lea.sflag [#allocation3], 1
    %309 = vsyncpa %s308, 1

</llo_original>
